<compile_context>
chip_gen: v7x
topology: tpu7x:2x2x1
jax: 0.10.0
libtpu: 0.0.40
codegen_flags: <defaults>
</compile_context>

<pallas_src>
import functools

import jax
import jax.numpy as jnp
from jax import lax
from jax.experimental import pallas as pl
from jax.experimental.pallas import tpu as pltpu

# ConvTranspose2d(k=4, s=2, p=1): output index oh = 2*ih - 1 + kh, so output row
# parity p only sees two (dh -> kh) taps (dh = input row offset).  Same for cols.
_TAPS = {0: {0: 1, -1: 3}, 1: {0: 2, 1: 0}}   # parity -> {dh: kh}


def _block_bytes(tile_h, w, cin, cout):
    """Per-grid-step VMEM bytes for the pipelined blocks (input + outputs)."""
    in_b = (tile_h + 2) * w * 3 * cin * 2          # bf16 packed+halo input block
    out_b = tile_h * w * 4 * cout * 2              # bf16 activation block
    stats_b = 2 * 4 * cout * 4                     # f32 per-tile stats
    return in_b + out_b + stats_b


def _weight_bytes(cin, cout):
    return 3 * (3 * cin) * (4 * cout) * 2 + 4 * cout * 4


def _choose_tile_h(n, h, w, cin, cout, budget_bytes=24 << 20):
    """Largest divisor of h whose double-buffered blocks fit the VMEM budget,
    keeping >=2 grid steps on a parallel axis when the batch alone can't."""
    divs = [t for t in range(1, h + 1)
            if h % t == 0 and (t == h or (t * w) % 8 == 0)]
    fitting = [t for t in divs
               if 2 * _block_bytes(t, w, cin, cout) <= budget_bytes]
    cands = fitting if fitting else divs[:1]       # last resort: smallest divisor
    if n < 2:                                      # feed both cores (megacore/v7x)
        par = [t for t in cands if h // t >= 2]
        if par:
            cands = par
    return max(cands)


def _deconv_relu_stats_kernel(x_ref, w_ref, b_ref, y_ref, stats_ref, *, m, w_out):
    """Transposed conv + bias + ReLU + per-tile BN partial stats.

    x_ref     : (1, 1, (tile_h+2)*W, 3*Cin) bf16; lanes packed as (dw=-1,0,+1, Cin),
                rows are zero-padded input rows of the tile incl. 1-row halo each side.
    w_ref     : (3, 3*Cin, 4*Cout) bf16; per-dh fused (zero-padded) tap matrices,
                output lanes ordered (p, q, Cout).
    b_ref     : (1, 4*Cout) f32 (bias tiled over the 4 parities).
    y_ref     : (1, m, 4*Cout) bf16; lane layout (p, q, Cout) -> lane-dense store.
    stats_ref : (1, 1, 2, 4*Cout) f32; [sum(y), sum(y*y)] over this tile.
    """
    # Three MXU dots (K = 3*Cin, N = 4*Cout), one f32 accumulator.
    acc = jnp.dot(x_ref[0, 0, 0:m, :], w_ref[0],                     # dh = -1
                  preferred_element_type=jnp.float32)
    acc = acc + jnp.dot(x_ref[0, 0, w_out:w_out + m, :], w_ref[1],   # dh = 0
                        preferred_element_type=jnp.float32)
    acc = acc + jnp.dot(x_ref[0, 0, 2 * w_out:2 * w_out + m, :], w_ref[2],  # dh = +1
                        preferred_element_type=jnp.float32)
    acc = jnp.maximum(acc + b_ref[...], 0.0)                         # bias + ReLU

    # Single lane-dense full-width store of the activation (bf16).
    y_ref[0, :, :] = acc.astype(y_ref.dtype)

    # Single-pass BN partial statistics in f32 (from the f32 accumulator).
    stats_ref[0, 0, 0:1, :] = jnp.sum(acc, axis=0, keepdims=True)
    stats_ref[0, 0, 1:2, :] = jnp.sum(acc * acc, axis=0, keepdims=True)


def decoder_forward(x_nchw, skip_nchw, params, *, eps=1e-5, tile_h=None,
                    compute_dtype=jnp.bfloat16):
    w, b = params["w"], params["b"]
    gamma, beta = params["gamma"], params["beta"]
    n, cin, h, wd = x_nchw.shape
    assert w.shape[0] == cin and w.shape[2:] == (4, 4), w.shape
    cout = w.shape[1]

    if tile_h is None:
        tile_h = _choose_tile_h(n, h, wd, cin, cout)
    assert h % tile_h == 0, (h, tile_h)
    nhb = h // tile_h
    if nhb > 1 and (tile_h * wd) % 8 != 0:   # keep second-minor block dim 8-aligned
        tile_h, nhb = h, 1
    m_tile = tile_h * wd

    # ---------------- glue: layout only (no compute) ----------------
    x_nhwc = jnp.transpose(x_nchw, (0, 2, 3, 1)).astype(compute_dtype)      # NHWC bf16
    # pack the 3 column shifts along lanes: (N, H, W, 3*Cin), lane = (dw+1)*Cin + ci
    x_wpad = jnp.pad(x_nhwc, ((0, 0), (0, 0), (1, 1), (0, 0)))
    x_packed = jnp.concatenate(
        [x_wpad[:, :, dw + 1:dw + 1 + wd, :] for dw in (-1, 0, 1)], axis=-1)
    # zero-pad H by 1, flatten rows, and build halo'd row blocks (only 2 halo rows
    # per block are duplicated).  TODO(synk): replace with pl.Element row-offset
    # indexing on x_flat to avoid the extra copy at very large Cin.
    x_hpad = jnp.pad(x_packed, ((0, 0), (1, 1), (0, 0), (0, 0)))
    x_flat = x_hpad.reshape(n, (h + 2) * wd, 3 * cin)
    x_halo = jnp.stack(
        [x_flat[:, hb * tile_h * wd:(hb * tile_h + tile_h + 2) * wd]
         for hb in range(nhb)], axis=1)            # (N, NHB, (tile_h+2)*W, 3*Cin)

    # Per-dh fused weights: (3, 3*Cin, 4*Cout), rows = (dw+1, Cin),
    # cols = (2*p + q, Cout); taps not used by a parity are zero-padded.
    w_t = jnp.transpose(w, (2, 3, 0, 1))           # (kh, kw, Cin, Cout)
    zero_blk = jnp.zeros((cin, cout), w.dtype)
    w_dh = []
    for dh in (-1, 0, 1):
        rows = []
        for dw in (-1, 0, 1):
            cols = []
            for p in (0, 1):
                for q in (0, 1):
                    if dh in _TAPS[p] and dw in _TAPS[q]:
                        cols.append(w_t[_TAPS[p][dh], _TAPS[q][dw]])   # (Cin, Cout)
                    else:
                        cols.append(zero_blk)
            rows.append(jnp.concatenate(cols, axis=1))                # (Cin, 4*Cout)
        w_dh.append(jnp.concatenate(rows, axis=0))                    # (3*Cin, 4*Cout)
    w_fused = jnp.stack(w_dh, axis=0).astype(compute_dtype)           # (3, 3*Cin, 4*Cout)

    bias4 = jnp.tile(b, 4).reshape(1, 4 * cout).astype(jnp.float32)

    vmem_limit = 2 * _block_bytes(tile_h, wd, cin, cout) + 2 * _weight_bytes(cin, cout)
    vmem_limit = int(min(max(vmem_limit + (4 << 20), 16 << 20), 60 << 20))
    cparams = pltpu.CompilerParams(
        dimension_semantics=("parallel", "parallel"),
        vmem_limit_bytes=vmem_limit)

    # -------- conv-transpose + bias + ReLU + partial BN stats (one pass) --------
    kernel = functools.partial(_deconv_relu_stats_kernel, m=m_tile, w_out=wd)
    y, stats = pl.pallas_call(
        kernel,
        out_shape=(jax.ShapeDtypeStruct((n, h * wd, 4 * cout), compute_dtype),
                   jax.ShapeDtypeStruct((n, nhb, 2, 4 * cout), jnp.float32)),
        grid=(n, nhb),
        in_specs=[
            pl.BlockSpec((1, 1, (tile_h + 2) * wd, 3 * cin),
                         lambda i, j: (i, j, 0, 0)),
            pl.BlockSpec((3, 3 * cin, 4 * cout), lambda i, j: (0, 0, 0)),
            pl.BlockSpec((1, 4 * cout), lambda i, j: (0, 0)),
        ],
        out_specs=(
            pl.BlockSpec((1, m_tile, 4 * cout), lambda i, j: (i, j, 0)),
            pl.BlockSpec((1, 1, 2, 4 * cout), lambda i, j: (i, j, 0, 0)),
        ),
        compiler_params=cparams,
    )(x_halo, w_fused, bias4)

    # ------------- tiny global reduction: BN batch statistics -------------
    count = n * h * wd * 4                                 # = N * (2H) * (2W)
    tot = jnp.sum(stats, axis=(0, 1)).reshape(2, 4, cout).sum(axis=1)   # (2, Cout)
    mean = tot[0] / count
    var = jnp.maximum(tot[1] / count - mean * mean, 0.0)   # biased var (as in BN)
    scale = gamma * lax.rsqrt(var + eps)
    shift = beta - mean * scale
    scale4 = jnp.tile(scale, 4).reshape(1, 1, 4 * cout).astype(jnp.float32)
    shift4 = jnp.tile(shift, 4).reshape(1, 1, 4 * cout).astype(jnp.float32)

    # ---- BN affine fused with the single layout pass (XLA fuses mul/add into
    # ---- the transpose copy); parity de-interleave + NHWC->NCHW in one go.
    z = y.astype(jnp.float32) * scale4 + shift4            # (N, H*W, 4*Cout) f32
    z6 = z.reshape(n, h, wd, 2, 2, cout)                   # (n, h, w, p, q, c)
    y_nchw = jnp.transpose(z6, (0, 5, 1, 3, 2, 4)).reshape(n, cout, 2 * h, 2 * wd)
    return jnp.concatenate([y_nchw, skip_nchw.astype(jnp.float32)], axis=1)


def decoder_reference(x_nchw, skip_nchw, params, *, eps=1e-5):
    """Pure-JAX f32 reference (XLA conv) for correctness checking."""
    w, b = params["w"], params["b"]
    gamma, beta = params["gamma"], params["beta"]
    cout = w.shape[1]
    w_conv = jnp.transpose(w, (1, 0, 2, 3))[:, :, ::-1, ::-1]   # (Cout, Cin, 4, 4)
    y = lax.conv_general_dilated(
        x_nchw, w_conv, window_strides=(1, 1), padding=((2, 2), (2, 2)),
        lhs_dilation=(2, 2), rhs_dilation=(1, 1),
        dimension_numbers=("NCHW", "OIHW", "NCHW"),
        precision=lax.Precision.HIGHEST)
    y = y + b.reshape(1, cout, 1, 1)
    y = jnp.maximum(y, 0.0)
    mean = jnp.mean(y, axis=(0, 2, 3), keepdims=True)
    var = jnp.mean((y - mean) ** 2, axis=(0, 2, 3), keepdims=True)
    y = (y - mean) * lax.rsqrt(var + eps)
    y = y * gamma.reshape(1, cout, 1, 1) + beta.reshape(1, cout, 1, 1)
    return jnp.concatenate([y, skip_nchw], axis=1)


if __name__ == "__main__":
    key = jax.random.PRNGKey(0)
    k1, k2, k3, k4, k5, k6 = jax.random.split(key, 6)

    # Small shapes consistent with the module's forward.  tile_h=8 exercises the
    # halo'd M-tiled grid (grid = (N, 2)); 4*Cout = 128 keeps the output lane-dense.
    N, Cin, Cout, H, W, Cskip = 2, 16, 32, 16, 16, 16
    x = jax.random.normal(k1, (N, Cin, H, W), jnp.float32)
    skip_info = jax.random.normal(k2, (N, Cskip, 2 * H, 2 * W), jnp.float32)

    params = dict(
        w=0.05 * jax.random.normal(k3, (Cin, Cout, 4, 4), jnp.float32),   # ConvTranspose2d.weight
        b=0.05 * jax.random.normal(k4, (Cout,), jnp.float32),             # ConvTranspose2d.bias
        gamma=1.0 + 0.1 * jax.random.normal(k5, (Cout,), jnp.float32),    # BatchNorm2d.weight
        beta=0.1 * jax.random.normal(k6, (Cout,), jnp.float32),           # BatchNorm2d.bias
    )

    out = jax.block_until_ready(decoder_forward(x, skip_info, params, tile_h=8))
    ref = jax.block_until_ready(decoder_reference(x, skip_info, params))

    assert out.shape == (N, Cout + Cskip, 2 * H, 2 * W), out.shape
    max_err = float(jnp.max(jnp.abs(out - ref)))
    # bf16 MXU inputs + bf16 intermediate activation (f32 stats) -> looser tolerance.
    assert jnp.allclose(out, ref, atol=4e-2, rtol=4e-2), f"max_err={max_err}"
    print("KERNEL_OK")
</pallas_src>

<mosaic_0001>
module attributes {stable_mosaic.version = 11 : i64} {
  func.func @_deconv_relu_stats_kernel(%arg0: i32, %arg1: i32, %arg2: memref<1x1x160x48xbf16, #tpu.memory_space<vmem>>, %arg3: memref<3x48x128xbf16, #tpu.memory_space<vmem>>, %arg4: memref<1x128xf32, #tpu.memory_space<vmem>>, %arg5: memref<1x128x128xbf16, #tpu.memory_space<vmem>>, %arg6: memref<1x1x2x128xf32, #tpu.memory_space<vmem>>) attributes {dimension_semantics = [#tpu.dimension_semantics<parallel>, #tpu.dimension_semantics<parallel>], iteration_bounds = array<i64: 2, 2>, scalar_prefetch = 0 : i64, scratch_operands = 0 : i64, tpu.core_type = #tpu.core_type<tc>, window_params = [{transform_indices = @transform_0, window_bounds = array<i64: 1, 1, 160, 48>}, {pipeline_mode = #tpu.pipeline_mode<synchronous>, transform_indices = @transform_1, window_bounds = array<i64: 3, 48, 128>}, {pipeline_mode = #tpu.pipeline_mode<synchronous>, transform_indices = @transform_2, window_bounds = array<i64: 1, 128>}, {transform_indices = @transform_3, window_bounds = array<i64: 1, 128, 128>}, {transform_indices = @transform_4, window_bounds = array<i64: 1, 1, 2, 128>}]} {
    %c0 = arith.constant 0 : index
    %c0_0 = arith.constant 0 : index
    %c0_1 = arith.constant 0 : index
    %c0_2 = arith.constant 0 : index
    %0 = vector.load %arg2[%c0, %c0_0, %c0_1, %c0_2] : memref<1x1x160x48xbf16, #tpu.memory_space<vmem>>, vector<1x1x128x48xbf16>
    %1 = vector.shape_cast %0 : vector<1x1x128x48xbf16> to vector<128x48xbf16>
    %c0_3 = arith.constant 0 : index
    %c0_4 = arith.constant 0 : index
    %c0_5 = arith.constant 0 : index
    %2 = vector.load %arg3[%c0_3, %c0_4, %c0_5] : memref<3x48x128xbf16, #tpu.memory_space<vmem>>, vector<1x48x128xbf16>
    %3 = vector.shape_cast %2 : vector<1x48x128xbf16> to vector<48x128xbf16>
    %cst = arith.constant dense<0.000000e+00> : vector<128x128xf32>
    %4 = tpu.matmul %1, %3, %cst {dimension_numbers = #tpu.dot_dimension_numbers<[1], [0], [0], [1], [0, 0, 1, 1], [], []>} : vector<128x48xbf16>, vector<48x128xbf16>, vector<128x128xf32> -> vector<128x128xf32>
    %c0_6 = arith.constant 0 : index
    %c0_7 = arith.constant 0 : index
    %c16 = arith.constant 16 : index
    %c0_8 = arith.constant 0 : index
    %5 = vector.load %arg2[%c0_6, %c0_7, %c16, %c0_8] : memref<1x1x160x48xbf16, #tpu.memory_space<vmem>>, vector<1x1x128x48xbf16>
    %6 = vector.shape_cast %5 : vector<1x1x128x48xbf16> to vector<128x48xbf16>
    %c1 = arith.constant 1 : index
    %c0_9 = arith.constant 0 : index
    %c0_10 = arith.constant 0 : index
    %7 = vector.load %arg3[%c1, %c0_9, %c0_10] : memref<3x48x128xbf16, #tpu.memory_space<vmem>>, vector<1x48x128xbf16>
    %8 = vector.shape_cast %7 : vector<1x48x128xbf16> to vector<48x128xbf16>
    %cst_11 = arith.constant dense<0.000000e+00> : vector<128x128xf32>
    %9 = tpu.matmul %6, %8, %cst_11 {dimension_numbers = #tpu.dot_dimension_numbers<[1], [0], [0], [1], [0, 0, 1, 1], [], []>} : vector<128x48xbf16>, vector<48x128xbf16>, vector<128x128xf32> -> vector<128x128xf32>
    %10 = arith.addf %4, %9 : vector<128x128xf32>
    %c0_12 = arith.constant 0 : index
    %c0_13 = arith.constant 0 : index
    %c32 = arith.constant 32 : index
    %c0_14 = arith.constant 0 : index
    %11 = vector.load %arg2[%c0_12, %c0_13, %c32, %c0_14] : memref<1x1x160x48xbf16, #tpu.memory_space<vmem>>, vector<1x1x128x48xbf16>
    %12 = vector.shape_cast %11 : vector<1x1x128x48xbf16> to vector<128x48xbf16>
    %c2 = arith.constant 2 : index
    %c0_15 = arith.constant 0 : index
    %c0_16 = arith.constant 0 : index
    %13 = vector.load %arg3[%c2, %c0_15, %c0_16] : memref<3x48x128xbf16, #tpu.memory_space<vmem>>, vector<1x48x128xbf16>
    %14 = vector.shape_cast %13 : vector<1x48x128xbf16> to vector<48x128xbf16>
    %cst_17 = arith.constant dense<0.000000e+00> : vector<128x128xf32>
    %15 = tpu.matmul %12, %14, %cst_17 {dimension_numbers = #tpu.dot_dimension_numbers<[1], [0], [0], [1], [0, 0, 1, 1], [], []>} : vector<128x48xbf16>, vector<48x128xbf16>, vector<128x128xf32> -> vector<128x128xf32>
    %16 = arith.addf %10, %15 : vector<128x128xf32>
    %c0_18 = arith.constant 0 : index
    %c0_19 = arith.constant 0 : index
    %17 = vector.load %arg4[%c0_18, %c0_19] : memref<1x128xf32, #tpu.memory_space<vmem>>, vector<1x128xf32>
    %18 = vector.broadcast %17 : vector<1x128xf32> to vector<128x128xf32>
    %19 = arith.addf %16, %18 : vector<128x128xf32>
    %cst_20 = arith.constant 0.000000e+00 : f32
    %20 = vector.broadcast %cst_20 : f32 to vector<128x128xf32>
    %21 = arith.maximumf %19, %20 : vector<128x128xf32>
    %22 = arith.truncf %21 : vector<128x128xf32> to vector<128x128xbf16>
    %c0_21 = arith.constant 0 : index
    %c0_22 = arith.constant 0 : index
    %c0_23 = arith.constant 0 : index
    %23 = vector.load %arg5[%c0_21, %c0_22, %c0_23] : memref<1x128x128xbf16, #tpu.memory_space<vmem>>, vector<1x128x128xbf16>
    %24 = vector.shape_cast %23 : vector<1x128x128xbf16> to vector<128x128xbf16>
    %25 = vector.shape_cast %22 : vector<128x128xbf16> to vector<1x128x128xbf16>
    tpu.vector_store %arg5[%c0_21, %c0_22, %c0_23], %25 {strides = array<i32>} : memref<1x128x128xbf16, #tpu.memory_space<vmem>>, vector<1x128x128xbf16>,
    %cst_24 = arith.constant dense<0.000000e+00> : vector<128xf32>
    %26 = vector.multi_reduction <add>, %21, %cst_24 [0] : vector<128x128xf32> to vector<128xf32>
    %27 = vector.shape_cast %26 : vector<128xf32> to vector<1x128xf32>
    %c0_25 = arith.constant 0 : index
    %c0_26 = arith.constant 0 : index
    %c0_27 = arith.constant 0 : index
    %c0_28 = arith.constant 0 : index
    %28 = vector.load %arg6[%c0_25, %c0_26, %c0_27, %c0_28] : memref<1x1x2x128xf32, #tpu.memory_space<vmem>>, vector<1x1x1x128xf32>
    %29 = vector.shape_cast %28 : vector<1x1x1x128xf32> to vector<1x128xf32>
    %30 = vector.shape_cast %27 : vector<1x128xf32> to vector<1x1x1x128xf32>
    tpu.vector_store %arg6[%c0_25, %c0_26, %c0_27, %c0_28], %30 {strides = array<i32>} : memref<1x1x2x128xf32, #tpu.memory_space<vmem>>, vector<1x1x1x128xf32>,
    %31 = arith.mulf %21, %21 : vector<128x128xf32>
    %cst_29 = arith.constant dense<0.000000e+00> : vector<128xf32>
    %32 = vector.multi_reduction <add>, %31, %cst_29 [0] : vector<128x128xf32> to vector<128xf32>
    %33 = vector.shape_cast %32 : vector<128xf32> to vector<1x128xf32>
    %c0_30 = arith.constant 0 : index
    %c0_31 = arith.constant 0 : index
    %c1_32 = arith.constant 1 : index
    %c0_33 = arith.constant 0 : index
    %34 = vector.load %arg6[%c0_30, %c0_31, %c1_32, %c0_33] : memref<1x1x2x128xf32, #tpu.memory_space<vmem>>, vector<1x1x1x128xf32>
    %35 = vector.shape_cast %34 : vector<1x1x1x128xf32> to vector<1x128xf32>
    %36 = vector.shape_cast %33 : vector<1x128xf32> to vector<1x1x1x128xf32>
    tpu.vector_store %arg6[%c0_30, %c0_31, %c1_32, %c0_33], %36 {strides = array<i32>} : memref<1x1x2x128xf32, #tpu.memory_space<vmem>>, vector<1x1x1x128xf32>,
    return
  }
  func.func @transform_0(%arg0: i32, %arg1: i32) -> (i32, i32, i32, i32) {
    %c0_i32 = arith.constant 0 : i32
    %c0_i32_0 = arith.constant 0 : i32
    %c0_i32_1 = arith.constant 0 : i32
    return %arg0, %arg1, %c0_i32, %c0_i32_0 : i32, i32, i32, i32
  }
  func.func @transform_1(%arg0: i32, %arg1: i32) -> (i32, i32, i32) {
    %c0_i32 = arith.constant 0 : i32
    %c0_i32_0 = arith.constant 0 : i32
    %c0_i32_1 = arith.constant 0 : i32
    %c0_i32_2 = arith.constant 0 : i32
    return %c0_i32, %c0_i32_0, %c0_i32_1 : i32, i32, i32
  }
  func.func @transform_2(%arg0: i32, %arg1: i32) -> (i32, i32) {
    %c0_i32 = arith.constant 0 : i32
    %c0_i32_0 = arith.constant 0 : i32
    %c0_i32_1 = arith.constant 0 : i32
    return %c0_i32, %c0_i32_0 : i32, i32
  }
  func.func @transform_3(%arg0: i32, %arg1: i32) -> (i32, i32, i32) {
    %c0_i32 = arith.constant 0 : i32
    %c0_i32_0 = arith.constant 0 : i32
    return %arg0, %arg1, %c0_i32 : i32, i32, i32
  }
  func.func @transform_4(%arg0: i32, %arg1: i32) -> (i32, i32, i32, i32) {
    %c0_i32 = arith.constant 0 : i32
    %c0_i32_0 = arith.constant 0 : i32
    %c0_i32_1 = arith.constant 0 : i32
    return %arg0, %arg1, %c0_i32, %c0_i32_0 : i32, i32, i32, i32
  }
}

</mosaic_0001>

<llo_original>
// kernel: tpu_custom_call.1
$region0: #{tpu_custom_call.1}
  #allocation0 [shape = 'u32[]', space=smem, size = 0x4, offset = 0x4, fixed_abs, tag = 'smem constant byte address 0x4 - core index']
  #allocation1 [shape = 'u32[144,128]{1,0:T(1,128)}', space=vmem, size = 0x12000, scoped, tag = 'internal scratch']
  %s0 = inlined_call_operand.vmem [shape: bf16[2,2,160,48], index: 0, kind: input, shape index: {}]
  %s1 = inlined_call_operand.vmem [shape: bf16[3,48,128], index: 1, kind: input, shape index: {}]
  %s2 = inlined_call_operand.vmem [shape: f32[1,128], index: 2, kind: input, shape index: {}]
  %s3 = inlined_call_operand.hbm [shape: bf16[2,256,128], index: 3, kind: output, shape index: {0}]
  %s4 = inlined_call_operand.hbm [shape: f32[2,2,2,128], index: 4, kind: output, shape index: {1}]
  %5 = xla_tuple %s3, %s4
  %s6 = sld [smem:[#allocation0]]
  $region53: #{tpu_custom_call.1} parent=0
    _
  %s8 = ssub.s32 1, %s6
  %s9 = scalar_select 0, %s8, %s6
  $region1: #{tpu_custom_call.1} parent=0
    #allocation2 [shape = 'u8[65536]{0}', space=vmem, size = 0x10000, scoped, tag = 'output window, operand 0']
    #allocation3 [shape = 's32[2]{0}', space=sflag, size = 0x8, scoped, tag = 'scoped memory for tpu_custom_call.1']
    #allocation4 [shape = 'u8[2048]{0}', space=vmem, size = 0x800, scoped, tag = 'output window, operand 1']
    #allocation5 [shape = 's32[2]{0}', space=sflag, size = 0x8, scoped, tag = 'scoped memory for tpu_custom_call.1']
    %10 = vsyncpa [#allocation3], 0
    %s11 = scalar_lea.sflag [#allocation3], 1
    %12 = vsyncpa %s11, 0
    %13 = vsyncpa [#allocation5], 0
    %s14 = scalar_lea.sflag [#allocation5], 1
    %15 = vsyncpa %s14, 0
    loop: start=0, step=1, limit=6
    $region2: #{tpu_custom_call.1} parent=1 // loop_pre_header
      _
    $region3: #{tpu_custom_call.1} parent=1 // loop_header
      %s17 = sphi 0, %s21
      %p18 = scmp.ge.s32.totalorder %s17, 6
      %s24 = sphi 0, %s36
      %s25 = sphi 0, %s32
      %s26 = sphi 0, %s24
      %s27 = sphi 0, %s25
      %s28 = sphi 0, %s26
      %s29 = sphi 0, %s27
      %s41 = sphi 0, %s43
      %s44 = sphi 0, %s41
      %s45 = sphi 0, %s44
      %s61 = sphi 0, %s45
      %s65 = sphi 0, %s65
      %s67 = sphi 0, %s65
      %s68 = sphi 0, %s67
      %s82 = sphi 0, %s68
      %s86 = sphi 0, %s86
      %s88 = sphi 0, %s86
      %s89 = sphi 0, %s88
      %s103 = sphi 0, %s89
      %s111 = sphi 0, %s113
      %s114 = sphi 0, %s111
      %s115 = sphi 0, %s114
      %s131 = sphi 0, %s115
      %s139 = sphi 0, %s141
      %s142 = sphi 0, %s139
      %s143 = sphi 0, %s142
      %s159 = sphi 0, %s143
    $region4: #{tpu_custom_call.1} parent=1 // loop_header_branch
      %20 = sbr.rel (%p18) target = $region8
    $region5: #{tpu_custom_call.1} parent=1 // loop_body
      %s22 = ssub.s32 %s17, 1
      %s23 = ssub.s32 %s17, 2
      %s30 = sadd.s32 1, %s25
      %p31 = scmp.ge.s32.totalorder %s30, 2
      %s32 = scalar_select %p31, 0, %s30
      %s33 = sadd.s32 1, %s24
      %s34 = scalar_select %p31, %s33, %s24
      %p35 = scmp.ge.s32.totalorder %s34, 2
      %s36 = scalar_select %p35, 0, %s34
      %s37 = ssub.s32 %s24, %s36
      %s38 = ssub.s32 %s25, %s32
      %s39 = sor.u32 %s37, %s38
      %p40 = scmp.eq.s32.totalorder %s39, 0
      %s42 = sadd.s32 %s41, 1
      %s43 = scalar_select %p40, %s41, %s42
      %p46 = pneg %p40
      %p47 = scmp.eq.s32.totalorder %s17, 3
      %p48 = por %p46, %p47
      %p49 = scmp.ne.s32.totalorder %s41, %s44
      %p50 = scmp.eq.s32.totalorder %s17, 0
      %p51 = por %p49, %p50
      %p52 = scmp.ne.s32.totalorder %s41, %s44
      %p53 = scmp.eq.s32.totalorder %s22, 3
      %p54 = por %p52, %p53
      %p55 = scmp.ne.s32.totalorder %s44, %s45
      %p56 = scmp.eq.s32.totalorder %s22, 0
      %p57 = por %p55, %p56
      %p58 = scmp.ne.s32.totalorder %s44, %s45
      %p59 = scmp.eq.s32.totalorder %s23, 3
      %p60 = por %p58, %p59
      %p62 = scmp.ne.s32.totalorder %s45, %s61
      %p63 = scmp.eq.s32.totalorder %s23, 0
      %p64 = por %p62, %p63
      %s66 = sadd.s32 %s65, 1
      %p69 = scmp.eq.s32.totalorder %s17, 3
      %p70 = scmp.ne.s32.totalorder %s65, %s67
      %p71 = scmp.eq.s32.totalorder %s17, 0
      %p72 = por %p70, %p71
      %p73 = scmp.ne.s32.totalorder %s65, %s67
      %p74 = scmp.eq.s32.totalorder %s22, 3
      %p75 = por %p73, %p74
      %p76 = scmp.ne.s32.totalorder %s67, %s68
      %p77 = scmp.eq.s32.totalorder %s22, 0
      %p78 = por %p76, %p77
      %p79 = scmp.ne.s32.totalorder %s67, %s68
      %p80 = scmp.eq.s32.totalorder %s23, 3
      %p81 = por %p79, %p80
      %p83 = scmp.ne.s32.totalorder %s68, %s82
      %p84 = scmp.eq.s32.totalorder %s23, 0
      %p85 = por %p83, %p84
      %s87 = sadd.s32 %s86, 1
      %p90 = scmp.eq.s32.totalorder %s17, 3
      %p91 = scmp.ne.s32.totalorder %s86, %s88
      %p92 = scmp.eq.s32.totalorder %s17, 0
      %p93 = por %p91, %p92
      %p94 = scmp.ne.s32.totalorder %s86, %s88
      %p95 = scmp.eq.s32.totalorder %s22, 3
      %p96 = por %p94, %p95
      %p97 = scmp.ne.s32.totalorder %s88, %s89
      %p98 = scmp.eq.s32.totalorder %s22, 0
      %p99 = por %p97, %p98
      %p100 = scmp.ne.s32.totalorder %s88, %s89
      %p101 = scmp.eq.s32.totalorder %s23, 3
      %p102 = por %p100, %p101
      %p104 = scmp.ne.s32.totalorder %s89, %s103
      %p105 = scmp.eq.s32.totalorder %s23, 0
      %p106 = por %p104, %p105
      %s107 = ssub.s32 %s24, %s36
      %s108 = ssub.s32 %s25, %s32
      %s109 = sor.u32 %s107, %s108
      %p110 = scmp.eq.s32.totalorder %s109, 0
      %s112 = sadd.s32 %s111, 1
      %s113 = scalar_select %p110, %s111, %s112
      %p116 = pneg %p110
      %p117 = scmp.eq.s32.totalorder %s17, 3
      %p118 = por %p116, %p117
      %p119 = scmp.ne.s32.totalorder %s111, %s114
      %p120 = scmp.eq.s32.totalorder %s17, 0
      %p121 = por %p119, %p120
      %p122 = scmp.ne.s32.totalorder %s111, %s114
      %p123 = scmp.eq.s32.totalorder %s22, 3
      %p124 = por %p122, %p123
      %p125 = scmp.ne.s32.totalorder %s114, %s115
      %p126 = scmp.eq.s32.totalorder %s22, 0
      %p127 = por %p125, %p126
      %p128 = scmp.ne.s32.totalorder %s114, %s115
      %p129 = scmp.eq.s32.totalorder %s23, 3
      %p130 = por %p128, %p129
      %p132 = scmp.ne.s32.totalorder %s115, %s131
      %p133 = scmp.eq.s32.totalorder %s23, 0
      %p134 = por %p132, %p133
      %s135 = ssub.s32 %s24, %s36
      %s136 = ssub.s32 %s25, %s32
      %s137 = sor.u32 %s135, %s136
      %p138 = scmp.eq.s32.totalorder %s137, 0
      %s140 = sadd.s32 %s139, 1
      %s141 = scalar_select %p138, %s139, %s140
      %p144 = pneg %p138
      %p145 = scmp.eq.s32.totalorder %s17, 3
      %p146 = por %p144, %p145
      %p147 = scmp.ne.s32.totalorder %s139, %s142
      %p148 = scmp.eq.s32.totalorder %s17, 0
      %p149 = por %p147, %p148
      %p150 = scmp.ne.s32.totalorder %s139, %s142
      %p151 = scmp.eq.s32.totalorder %s22, 3
      %p152 = por %p150, %p151
      %p153 = scmp.ne.s32.totalorder %s142, %s143
      %p154 = scmp.eq.s32.totalorder %s22, 0
      %p155 = por %p153, %p154
      %p156 = scmp.ne.s32.totalorder %s142, %s143
      %p157 = scmp.eq.s32.totalorder %s23, 3
      %p158 = por %p156, %p157
      %p160 = scmp.ne.s32.totalorder %s143, %s159
      %p161 = scmp.eq.s32.totalorder %s23, 0
      %p162 = por %p160, %p161
      %p163 = scmp.le.s32.totalorder 1, %s17
      %p164 = scmp.lt.s32.totalorder %s17, 5
      %p165 = pnand %p163, %p164
      %p166 = pneg %p165
      // Predicated region
      $region9: #{tpu_custom_call.1} parent=5 // pred_check
        _
      $region10: #{tpu_custom_call.1} parent=5 // pred_check_branch
        %168 = sbr.rel (%p165) target = $region12
      $region11: #{tpu_custom_call.1} parent=5 // pred_region
        %s169 = ssub.s32 %s17, 1
        // Predicated region
        $region13: #{tpu_custom_call.1} parent=11 // pred_check
          %p170 = pneg %p78
        $region14: #{tpu_custom_call.1} parent=11 // pred_check_branch
          %172 = sbr.rel (%p170) target = $region16
        $region15: #{tpu_custom_call.1} parent=11 // pred_region
          _
        $region16: #{tpu_custom_call.1} parent=11 // pred_fallthru
          _
        // Predicated region
        $region17: #{tpu_custom_call.1} parent=11 // pred_check
          %p173 = pneg %p99
        $region18: #{tpu_custom_call.1} parent=11 // pred_check_branch
          %175 = sbr.rel (%p173) target = $region20
        $region19: #{tpu_custom_call.1} parent=11 // pred_region
          _
        $region20: #{tpu_custom_call.1} parent=11 // pred_fallthru
          _
      $region12: #{tpu_custom_call.1} parent=5 // pred_fallthru
        _
      %p176 = scmp.lt.s32.totalorder %s17, 4
      // Predicated region
      $region21: #{tpu_custom_call.1} parent=5 // pred_check
        %p177 = pneg %p176
      $region22: #{tpu_custom_call.1} parent=5 // pred_check_branch
        %179 = sbr.rel (%p177) target = $region24
      $region23: #{tpu_custom_call.1} parent=5 // pred_region
        // Predicated region
        $region25: #{tpu_custom_call.1} parent=23 // pred_check
          %p180 = pneg %p51
        $region26: #{tpu_custom_call.1} parent=23 // pred_check_branch
          %182 = sbr.rel (%p180) target = $region28
        $region27: #{tpu_custom_call.1} parent=23 // pred_region
          %p183 = scmp.lt.s32.totalorder %s24, 1
          %s184 = scalar_select %p183, %s24, 1
          %p185 = scmp.lt.s32.totalorder %s25, 1
          %s186 = scalar_select %p185, %s25, 1
          %s187 = smul.addr %s186, 20
          %s188 = smul.addr %s184, 40
          %s189 = sadd.s32 %s187, %s188
          %s190 = smul.addr %s189, 4
          %s191 = scalar_lea.vmem %s0, %s190
        $region28: #{tpu_custom_call.1} parent=23 // pred_fallthru
          _
      $region24: #{tpu_custom_call.1} parent=5 // pred_fallthru
        _
      %p192 = scmp.le.s32.totalorder 1, %s17
      %p193 = scmp.lt.s32.totalorder %s17, 5
      %p194 = pnand %p192, %p193
      %p195 = pneg %p194
      // Predicated region
      $region29: #{tpu_custom_call.1} parent=5 // pred_check
        _
      $region30: #{tpu_custom_call.1} parent=5 // pred_check_branch
        %197 = sbr.rel (%p194) target = $region32
      $region31: #{tpu_custom_call.1} parent=5 // pred_region
        %s198 = ssub.s32 %s17, 1
        %p199 = scmp.lt.s32.totalorder %s26, 1
        %s200 = scalar_select %p199, %s26, 1
        %p201 = scmp.lt.s32.totalorder %s27, 1
        %s202 = scalar_select %p201, %s27, 1
        %s203 = smul.addr %s202, 20
        %s204 = smul.addr %s200, 40
        %s205 = sadd.s32 %s203, %s204
        %s206 = smul.addr %s205, 4
        %s207 = scalar_lea.vmem %s0, %s206
        %p208 = pneg %p57
        %p209 = pneg %p54
        %p210 = pneg %p78
        %p211 = pneg %p75
        %p212 = pneg %p99
        %p213 = pneg %p96
        %p214 = pneg %p127
        %p215 = pneg %p124
        %s216 = sand.u32 %s114, 1
        %s217 = scalar_lea.sflag [#allocation3], %s216
        %s218 = sand.u32 %s114, 1
        %s219 = smul.addr %s218, 64
        %s220 = scalar_lea.vmem [#allocation2], %s219
        %p221 = pneg %p155
        %p222 = pneg %p152
        %s223 = sand.u32 %s142, 1
        %s224 = scalar_lea.sflag [#allocation5], %s223
        %s225 = sand.u32 %s142, 1
        %s226 = smul.addr %s225, 2
        %s227 = scalar_lea.vmem [#allocation4], %s226
        %p228 = scmp.lt.s32.totalorder %s26, 1
        %s229 = scalar_select %p228, %s26, 1
        %p230 = scmp.lt.s32.totalorder %s27, 1
        %s231 = scalar_select %p230, %s27, 1
        %s232 = smul.addr %s231, 20
        %s233 = smul.addr %s229, 40
        %s234 = sadd.s32 %s232, %s233
        %s235 = smul.addr %s234, 4
        %s236 = scalar_lea.vmem %s0, %s235
        %s237 = smul.u32 16, %s27
        %v239 = vld [vmem:[%s236] sm:$0xf]
        %v240 = vld [vmem:[%s236 + $0x4] sm:$0xf]
        %v241 = vld [vmem:[%s236 + $0x8] sm:$0xf]
        %v242 = vld [vmem:[%s236 + $0xc] sm:$0xf]
        %v243 = vld [vmem:[%s236 + $0x10] sm:$0xf]
        %v244 = vld [vmem:[%s236 + $0x14] sm:$0xf]
        %v245 = vld [vmem:[%s236 + $0x18] sm:$0xf]
        %v246 = vld [vmem:[%s236 + $0x1c] sm:$0xf]
        %v247 = vld [vmem:[%s236 + $0x20] sm:$0xf]
        %v248 = vld [vmem:[%s236 + $0x24] sm:$0xf]
        %v249 = vld [vmem:[%s236 + $0x28] sm:$0xf]
        %v250 = vld [vmem:[%s236 + $0x2c] sm:$0xf]
        %v251 = vld [vmem:[%s236 + $0x30] sm:$0xf]
        %v252 = vld [vmem:[%s236 + $0x34] sm:$0xf]
        %v253 = vld [vmem:[%s236 + $0x38] sm:$0xf]
        %v254 = vld [vmem:[%s236 + $0x3c] sm:$0xf]
        %v255 = vld [vmem:[%s1] sm:$0xf]
        %v256 = vld [vmem:[%s1 + $0x4] sm:$0xf]
        %v257 = vld [vmem:[%s1 + $0x8] sm:$0xf]
        %v258 = vld [vmem:[%s1 + $0xc] sm:$0xf]
        %v259 = vld [vmem:[%s1 + $0x10] sm:$0xf]
        %v260 = vld [vmem:[%s1 + $0x14] sm:$0xf]
        %v261 = vld [vmem:[%s236 + $0x40] sm:$0xf]
        %v262 = vld [vmem:[%s236 + $0x44] sm:$0xf]
        %s263 = scalar_lea.vmem %s1, 24
        %v264 = vld [vmem:[%s263] sm:$0xf]
        %v265 = vld [vmem:[%s263 + $0x4] sm:$0xf]
        %v266 = vld [vmem:[%s263 + $0x8] sm:$0xf]
        %v267 = vld [vmem:[%s263 + $0xc] sm:$0xf]
        %v268 = vld [vmem:[%s263 + $0x10] sm:$0xf]
        %v269 = vld [vmem:[%s263 + $0x14] sm:$0xf]
        %v286 = vunpack.c.l.b16 %v241
        %v287 = vunpack.c.l.b16 %v242
        %v288 = vunpack.c.l.b16 %v243
        %v289 = vunpack.c.l.b16 %v244
        %v290 = vunpack.c.l.b16 %v245
        %v291 = vunpack.c.l.b16 %v246
        %v292 = vunpack.c.l.b16 %v247
        %v293 = vunpack.c.l.b16 %v248
        %v294 = vunpack.c.l.b16 %v249
        %v295 = vunpack.c.l.b16 %v250
        %v296 = vunpack.c.l.b16 %v251
        %v297 = vunpack.c.l.b16 %v252
        %v298 = vunpack.c.l.b16 %v253
        %v299 = vunpack.c.l.b16 %v254
        %v300 = vunpack.c.l.b16 %v261
        %v301 = vunpack.c.l.b16 %v262
        %v302 = vpack.c.b16 %v287, %v286
        %v303 = vpack.c.b16 %v289, %v288
        %v304 = vpack.c.b16 %v291, %v290
        %v305 = vpack.c.b16 %v293, %v292
        %v306 = vpack.c.b16 %v295, %v294
        %v307 = vpack.c.b16 %v297, %v296
        %v308 = vpack.c.b16 %v299, %v298
        %v309 = vpack.c.b16 %v301, %v300
        %v316 = vunpack.c.l.b16 %v264
        %v317 = vunpack.c.l.b16 %v265
        %v318 = vunpack.c.l.b16 %v266
        %v319 = vunpack.c.l.b16 %v267
        %v320 = vunpack.c.l.b16 %v268
        %v321 = vunpack.c.l.b16 %v269
        %v322 = vpack.c.b16 %v317, %v316
        %v323 = vpack.c.b16 %v319, %v318
        %v324 = vpack.c.b16 %v321, %v320
        %vm328 = vcmask 392192
        %v330 = vsel %vm328, %v302, 0
        %v333 = vsel %vm328, %v303, 0
        %v336 = vsel %vm328, %v304, 0
        %v339 = vsel %vm328, %v305, 0
        %v342 = vsel %vm328, %v306, 0
        %v345 = vsel %vm328, %v307, 0
        %v348 = vsel %vm328, %v308, 0
        %v351 = vsel %vm328, %v309, 0
        %353 = vmatprep.subr.bf16.mxu0 0
        %354 = vmatpush1.bf16.msra.mxu0 %v322
        %355 = vmatprep.subr.bf16.mxu0 0
        %356 = vmatpush1.bf16.msra.mxu0 %v323
        %357 = vmatprep.subr.bf16.mxu0 0
        %358 = vmatpush1.bf16.msra.mxu0 %v324
        %359 = vmatprep.subr.bf16.mxu0 0
        %360 = vmatpush1.bf16.msra.mxu0 0
        %361 = vmatprep.subr.bf16.mxu0 0
        %362 = vmatpush1.bf16.msra.mxu0 0
        %363 = vmatprep.subr.bf16.mxu0 0
        %364 = vmatpush1.bf16.msra.mxu0 0
        %365 = vmatprep.subr.bf16.mxu0 0
        %366 = vmatpush1.bf16.msra.mxu0 0
        %367 = vmatprep.subr.bf16.mxu0 0
        %368 = vmatpush1.bf16.msra.mxu0 0
        %369 = vmatprep.subr.bf16.mxu0 0
        %370 = vmatpush1.bf16.msra.mxu0 0
        %371 = vmatprep.subr.bf16.mxu0 0
        %372 = vmatpush1.bf16.msra.mxu0 0
        %373 = vmatprep.subr.bf16.mxu0 0
        %374 = vmatpush1.bf16.msra.mxu0 0
        %375 = vmatprep.subr.bf16.mxu0 0
        %376 = vmatpush1.bf16.msra.mxu0 0
        %377 = vmatprep.subr.bf16.mxu0 0
        %378 = vmatpush1.bf16.msra.mxu0 0
        %379 = vmatprep.subr.bf16.mxu0 0
        %380 = vmatpush1.bf16.msra.mxu0 0
        %381 = vmatprep.subr.bf16.mxu0 0
        %382 = vmatpush1.bf16.msra.mxu0 0
        %383 = vmatprep.subr.bf16.mxu0 0
        %384 = vmatpush1.bf16.msra.mxu0 0
        %385 = vmatprep.mubr.bf16.mxu0 0
        %386 = vmatmul.mubr.bf16.gmra.mrb[0].mxu0 %v330
        %v387 = vpop.f32.mrb[0].mxu0
        %v388 = vadd.f32 0.0, %v387
        %v389 = vpop.f32.mrb[0].mxu0
        %v390 = vpop.f32.mrb[0].mxu0
        %v391 = vadd.f32 0.0, %v390
        %v392 = vpop.f32.mrb[0].mxu0
        %393 = vmatprep.mubr.bf16.mxu0 0
        %394 = vmatmul.mubr.bf16.gmra.mrb[0].mxu0 %v333
        %v395 = vpop.f32.mrb[0].mxu0
        %v396 = vadd.f32 0.0, %v395
        %v397 = vpop.f32.mrb[0].mxu0
        %v398 = vpop.f32.mrb[0].mxu0
        %v399 = vadd.f32 0.0, %v398
        %v400 = vpop.f32.mrb[0].mxu0
        %401 = vmatprep.mubr.bf16.mxu0 0
        %402 = vmatmul.mubr.bf16.gmra.mrb[0].mxu0 %v336
        %v403 = vpop.f32.mrb[0].mxu0
        %v404 = vadd.f32 0.0, %v403
        %v405 = vpop.f32.mrb[0].mxu0
        %v406 = vpop.f32.mrb[0].mxu0
        %v407 = vadd.f32 0.0, %v406
        %v408 = vpop.f32.mrb[0].mxu0
        %409 = vmatprep.mubr.bf16.mxu0 0
        %410 = vmatmul.mubr.bf16.gmra.mrb[0].mxu0 %v339
        %v411 = vpop.f32.mrb[0].mxu0
        %v412 = vadd.f32 0.0, %v411
        %v413 = vpop.f32.mrb[0].mxu0
        %v414 = vpop.f32.mrb[0].mxu0
        %v415 = vadd.f32 0.0, %v414
        %v416 = vpop.f32.mrb[0].mxu0
        %417 = vmatprep.mubr.bf16.mxu0 0
        %418 = vmatmul.mubr.bf16.gmra.mrb[0].mxu0 %v342
        %v419 = vpop.f32.mrb[0].mxu0
        %v420 = vadd.f32 0.0, %v419
        %v421 = vpop.f32.mrb[0].mxu0
        %v422 = vpop.f32.mrb[0].mxu0
        %v423 = vadd.f32 0.0, %v422
        %v424 = vpop.f32.mrb[0].mxu0
        %425 = vmatprep.mubr.bf16.mxu0 0
        %426 = vmatmul.mubr.bf16.gmra.mrb[0].mxu0 %v345
        %v427 = vpop.f32.mrb[0].mxu0
        %v428 = vadd.f32 0.0, %v427
        %v429 = vpop.f32.mrb[0].mxu0
        %v430 = vpop.f32.mrb[0].mxu0
        %v431 = vadd.f32 0.0, %v430
        %v432 = vpop.f32.mrb[0].mxu0
        %433 = vmatprep.mubr.bf16.mxu0 0
        %434 = vmatmul.mubr.bf16.gmra.mrb[0].mxu0 %v348
        %v435 = vpop.f32.mrb[0].mxu0
        %v436 = vadd.f32 0.0, %v435
        %v437 = vpop.f32.mrb[0].mxu0
        %v438 = vpop.f32.mrb[0].mxu0
        %v439 = vadd.f32 0.0, %v438
        %v440 = vpop.f32.mrb[0].mxu0
        %441 = vmatprep.mubr.bf16.mxu0 0
        %442 = vmatmul.mubr.bf16.gmra.mrb[0].mxu0 %v351
        %v443 = vpop.f32.mrb[0].mxu0
        %v444 = vadd.f32 0.0, %v443
        %v445 = vpop.f32.mrb[0].mxu0
        %v446 = vpop.f32.mrb[0].mxu0
        %v447 = vadd.f32 0.0, %v446
        %v448 = vpop.f32.mrb[0].mxu0
        %449 = vdwg.mxu0
        %v452 = vunpack.c.l.b16 %v239
        %v453 = vunpack.c.l.b16 %v240
        %v454 = vpack.c.b16 %v453, %v452
        %v461 = vunpack.c.l.b16 %v255
        %v462 = vunpack.c.l.b16 %v256
        %v463 = vunpack.c.l.b16 %v257
        %v464 = vunpack.c.l.b16 %v258
        %v465 = vunpack.c.l.b16 %v259
        %v466 = vunpack.c.l.b16 %v260
        %v467 = vpack.c.b16 %v462, %v461
        %v468 = vpack.c.b16 %v464, %v463
        %v469 = vpack.c.b16 %v466, %v465
        %v474 = vsel %vm328, %v454, 0
        %476 = vmatprep.subr.bf16.mxu0 0
        %477 = vmatpush1.bf16.msra.mxu0 %v467
        %478 = vmatprep.subr.bf16.mxu0 0
        %479 = vmatpush1.bf16.msra.mxu0 %v468
        %480 = vmatprep.subr.bf16.mxu0 0
        %481 = vmatpush1.bf16.msra.mxu0 %v469
        %482 = vmatprep.subr.bf16.mxu0 0
        %483 = vmatpush1.bf16.msra.mxu0 0
        %484 = vmatprep.subr.bf16.mxu0 0
        %485 = vmatpush1.bf16.msra.mxu0 0
        %486 = vmatprep.subr.bf16.mxu0 0
        %487 = vmatpush1.bf16.msra.mxu0 0
        %488 = vmatprep.subr.bf16.mxu0 0
        %489 = vmatpush1.bf16.msra.mxu0 0
        %490 = vmatprep.subr.bf16.mxu0 0
        %491 = vmatpush1.bf16.msra.mxu0 0
        %492 = vmatprep.subr.bf16.mxu0 0
        %493 = vmatpush1.bf16.msra.mxu0 0
        %494 = vmatprep.subr.bf16.mxu0 0
        %495 = vmatpush1.bf16.msra.mxu0 0
        %496 = vmatprep.subr.bf16.mxu0 0
        %497 = vmatpush1.bf16.msra.mxu0 0
        %498 = vmatprep.subr.bf16.mxu0 0
        %499 = vmatpush1.bf16.msra.mxu0 0
        %500 = vmatprep.subr.bf16.mxu0 0
        %501 = vmatpush1.bf16.msra.mxu0 0
        %502 = vmatprep.subr.bf16.mxu0 0
        %503 = vmatpush1.bf16.msra.mxu0 0
        %504 = vmatprep.subr.bf16.mxu0 0
        %505 = vmatpush1.bf16.msra.mxu0 0
        %506 = vmatprep.subr.bf16.mxu0 0
        %507 = vmatpush1.bf16.msra.mxu0 0
        %508 = vmatprep.mubr.bf16.mxu0 0
        %509 = vmatmul.mubr.bf16.gmra.mrb[0].mxu0 %v474
        %v510 = vpop.f32.mrb[0].mxu0
        %v511 = vadd.f32 %v388, %v510
        %v512 = vpop.f32.mrb[0].mxu0
        %v513 = vpop.f32.mrb[0].mxu0
        %v514 = vadd.f32 %v391, %v513
        %v515 = vpop.f32.mrb[0].mxu0
        %516 = vmatprep.mubr.bf16.mxu0 0
        %517 = vmatmul.mubr.bf16.gmra.mrb[0].mxu0 %v330
        %v518 = vpop.f32.mrb[0].mxu0
        %v519 = vadd.f32 %v396, %v518
        %v520 = vpop.f32.mrb[0].mxu0
        %v521 = vpop.f32.mrb[0].mxu0
        %v522 = vadd.f32 %v399, %v521
        %v523 = vpop.f32.mrb[0].mxu0
        %524 = vmatprep.mubr.bf16.mxu0 0
        %525 = vmatmul.mubr.bf16.gmra.mrb[0].mxu0 %v333
        %v526 = vpop.f32.mrb[0].mxu0
        %v527 = vadd.f32 %v404, %v526
        %v528 = vpop.f32.mrb[0].mxu0
        %v529 = vpop.f32.mrb[0].mxu0
        %v530 = vadd.f32 %v407, %v529
        %v531 = vpop.f32.mrb[0].mxu0
        %532 = vmatprep.mubr.bf16.mxu0 0
        %533 = vmatmul.mubr.bf16.gmra.mrb[0].mxu0 %v336
        %v534 = vpop.f32.mrb[0].mxu0
        %v535 = vadd.f32 %v412, %v534
        %v536 = vpop.f32.mrb[0].mxu0
        %v537 = vpop.f32.mrb[0].mxu0
        %v538 = vadd.f32 %v415, %v537
        %v539 = vpop.f32.mrb[0].mxu0
        %540 = vmatprep.mubr.bf16.mxu0 0
        %541 = vmatmul.mubr.bf16.gmra.mrb[0].mxu0 %v339
        %v542 = vpop.f32.mrb[0].mxu0
        %v543 = vadd.f32 %v420, %v542
        %v544 = vpop.f32.mrb[0].mxu0
        %v545 = vpop.f32.mrb[0].mxu0
        %v546 = vadd.f32 %v423, %v545
        %v547 = vpop.f32.mrb[0].mxu0
        %548 = vmatprep.mubr.bf16.mxu0 0
        %549 = vmatmul.mubr.bf16.gmra.mrb[0].mxu0 %v342
        %v550 = vpop.f32.mrb[0].mxu0
        %v551 = vadd.f32 %v428, %v550
        %v552 = vpop.f32.mrb[0].mxu0
        %v553 = vpop.f32.mrb[0].mxu0
        %v554 = vadd.f32 %v431, %v553
        %v555 = vpop.f32.mrb[0].mxu0
        %556 = vmatprep.mubr.bf16.mxu0 0
        %557 = vmatmul.mubr.bf16.gmra.mrb[0].mxu0 %v345
        %v558 = vpop.f32.mrb[0].mxu0
        %v559 = vadd.f32 %v436, %v558
        %v560 = vpop.f32.mrb[0].mxu0
        %v561 = vpop.f32.mrb[0].mxu0
        %v562 = vadd.f32 %v439, %v561
        %v563 = vpop.f32.mrb[0].mxu0
        %564 = vmatprep.mubr.bf16.mxu0 0
        %565 = vmatmul.mubr.bf16.gmra.mrb[0].mxu0 %v348
        %v566 = vpop.f32.mrb[0].mxu0
        %v567 = vadd.f32 %v444, %v566
        %v568 = vpop.f32.mrb[0].mxu0
        %v569 = vpop.f32.mrb[0].mxu0
        %v570 = vadd.f32 %v447, %v569
        %v571 = vpop.f32.mrb[0].mxu0
        %572 = vdwg.mxu0
        %v573 = vld [vmem:[%s236 + $0x10] sm:$0xf]
        %v574 = vld [vmem:[%s236 + $0x14] sm:$0xf]
        %v575 = vld [vmem:[%s236 + $0x18] sm:$0xf]
        %v576 = vld [vmem:[%s236 + $0x1c] sm:$0xf]
        %v577 = vld [vmem:[%s236 + $0x20] sm:$0xf]
        %v578 = vld [vmem:[%s236 + $0x24] sm:$0xf]
        %v579 = vld [vmem:[%s236 + $0x28] sm:$0xf]
        %v580 = vld [vmem:[%s236 + $0x2c] sm:$0xf]
        %v581 = vld [vmem:[%s236 + $0x30] sm:$0xf]
        %v582 = vld [vmem:[%s236 + $0x34] sm:$0xf]
        %v583 = vld [vmem:[%s236 + $0x38] sm:$0xf]
        %v584 = vld [vmem:[%s236 + $0x3c] sm:$0xf]
        %v585 = vld [vmem:[%s236 + $0x40] sm:$0xf]
        %v586 = vld [vmem:[%s236 + $0x44] sm:$0xf]
        %v587 = vld [vmem:[%s236 + $0x48] sm:$0xf]
        %v588 = vld [vmem:[%s236 + $0x4c] sm:$0xf]
        %s589 = scalar_lea.vmem %s1, 48
        %v590 = vld [vmem:[%s589] sm:$0xf]
        %v591 = vld [vmem:[%s589 + $0x4] sm:$0xf]
        %v592 = vld [vmem:[%s589 + $0x8] sm:$0xf]
        %v593 = vld [vmem:[%s589 + $0xc] sm:$0xf]
        %v594 = vld [vmem:[%s589 + $0x10] sm:$0xf]
        %v595 = vld [vmem:[%s589 + $0x14] sm:$0xf]
        %v612 = vunpack.c.l.b16 %v573
        %v613 = vunpack.c.l.b16 %v574
        %v614 = vunpack.c.l.b16 %v575
        %v615 = vunpack.c.l.b16 %v576
        %v616 = vunpack.c.l.b16 %v577
        %v617 = vunpack.c.l.b16 %v578
        %v618 = vunpack.c.l.b16 %v579
        %v619 = vunpack.c.l.b16 %v580
        %v620 = vunpack.c.l.b16 %v581
        %v621 = vunpack.c.l.b16 %v582
        %v622 = vunpack.c.l.b16 %v583
        %v623 = vunpack.c.l.b16 %v584
        %v624 = vunpack.c.l.b16 %v585
        %v625 = vunpack.c.l.b16 %v586
        %v626 = vunpack.c.l.b16 %v587
        %v627 = vunpack.c.l.b16 %v588
        %v628 = vpack.c.b16 %v613, %v612
        %v629 = vpack.c.b16 %v615, %v614
        %v630 = vpack.c.b16 %v617, %v616
        %v631 = vpack.c.b16 %v619, %v618
        %v632 = vpack.c.b16 %v621, %v620
        %v633 = vpack.c.b16 %v623, %v622
        %v634 = vpack.c.b16 %v625, %v624
        %v635 = vpack.c.b16 %v627, %v626
        %v642 = vunpack.c.l.b16 %v590
        %v643 = vunpack.c.l.b16 %v591
        %v644 = vunpack.c.l.b16 %v592
        %v645 = vunpack.c.l.b16 %v593
        %v646 = vunpack.c.l.b16 %v594
        %v647 = vunpack.c.l.b16 %v595
        %v648 = vpack.c.b16 %v643, %v642
        %v649 = vpack.c.b16 %v645, %v644
        %v650 = vpack.c.b16 %v647, %v646
        %v655 = vsel %vm328, %v628, 0
        %v658 = vsel %vm328, %v629, 0
        %v661 = vsel %vm328, %v630, 0
        %v664 = vsel %vm328, %v631, 0
        %v667 = vsel %vm328, %v632, 0
        %v670 = vsel %vm328, %v633, 0
        %v673 = vsel %vm328, %v634, 0
        %v676 = vsel %vm328, %v635, 0
        %678 = vmatprep.subr.bf16.mxu0 0
        %679 = vmatpush1.bf16.msra.mxu0 %v648
        %680 = vmatprep.subr.bf16.mxu0 0
        %681 = vmatpush1.bf16.msra.mxu0 %v649
        %682 = vmatprep.subr.bf16.mxu0 0
        %683 = vmatpush1.bf16.msra.mxu0 %v650
        %684 = vmatprep.subr.bf16.mxu0 0
        %685 = vmatpush1.bf16.msra.mxu0 0
        %686 = vmatprep.subr.bf16.mxu0 0
        %687 = vmatpush1.bf16.msra.mxu0 0
        %688 = vmatprep.subr.bf16.mxu0 0
        %689 = vmatpush1.bf16.msra.mxu0 0
        %690 = vmatprep.subr.bf16.mxu0 0
        %691 = vmatpush1.bf16.msra.mxu0 0
        %692 = vmatprep.subr.bf16.mxu0 0
        %693 = vmatpush1.bf16.msra.mxu0 0
        %694 = vmatprep.subr.bf16.mxu0 0
        %695 = vmatpush1.bf16.msra.mxu0 0
        %696 = vmatprep.subr.bf16.mxu0 0
        %697 = vmatpush1.bf16.msra.mxu0 0
        %698 = vmatprep.subr.bf16.mxu0 0
        %699 = vmatpush1.bf16.msra.mxu0 0
        %700 = vmatprep.subr.bf16.mxu0 0
        %701 = vmatpush1.bf16.msra.mxu0 0
        %702 = vmatprep.subr.bf16.mxu0 0
        %703 = vmatpush1.bf16.msra.mxu0 0
        %704 = vmatprep.subr.bf16.mxu0 0
        %705 = vmatpush1.bf16.msra.mxu0 0
        %706 = vmatprep.subr.bf16.mxu0 0
        %707 = vmatpush1.bf16.msra.mxu0 0
        %708 = vmatprep.subr.bf16.mxu0 0
        %709 = vmatpush1.bf16.msra.mxu0 0
        %710 = vmatprep.mubr.bf16.mxu0 0
        %711 = vmatmul.mubr.bf16.gmra.mrb[0].mxu0 %v655
        %v712 = vpop.f32.mrb[0].mxu0
        %v713 = vadd.f32 0.0, %v712
        %v714 = vpop.f32.mrb[0].mxu0
        %v715 = vpop.f32.mrb[0].mxu0
        %v716 = vadd.f32 0.0, %v715
        %v717 = vpop.f32.mrb[0].mxu0
        %718 = vmatprep.mubr.bf16.mxu0 0
        %719 = vmatmul.mubr.bf16.gmra.mrb[0].mxu0 %v658
        %v720 = vpop.f32.mrb[0].mxu0
        %v721 = vadd.f32 0.0, %v720
        %v722 = vpop.f32.mrb[0].mxu0
        %v723 = vpop.f32.mrb[0].mxu0
        %v724 = vadd.f32 0.0, %v723
        %v725 = vpop.f32.mrb[0].mxu0
        %726 = vmatprep.mubr.bf16.mxu0 0
        %727 = vmatmul.mubr.bf16.gmra.mrb[0].mxu0 %v661
        %v728 = vpop.f32.mrb[0].mxu0
        %v729 = vadd.f32 0.0, %v728
        %v730 = vpop.f32.mrb[0].mxu0
        %v731 = vpop.f32.mrb[0].mxu0
        %v732 = vadd.f32 0.0, %v731
        %v733 = vpop.f32.mrb[0].mxu0
        %734 = vmatprep.mubr.bf16.mxu0 0
        %735 = vmatmul.mubr.bf16.gmra.mrb[0].mxu0 %v664
        %v736 = vpop.f32.mrb[0].mxu0
        %v737 = vadd.f32 0.0, %v736
        %v738 = vpop.f32.mrb[0].mxu0
        %v739 = vpop.f32.mrb[0].mxu0
        %v740 = vadd.f32 0.0, %v739
        %v741 = vpop.f32.mrb[0].mxu0
        %742 = vmatprep.mubr.bf16.mxu0 0
        %743 = vmatmul.mubr.bf16.gmra.mrb[0].mxu0 %v667
        %v744 = vpop.f32.mrb[0].mxu0
        %v745 = vadd.f32 0.0, %v744
        %v746 = vpop.f32.mrb[0].mxu0
        %v747 = vpop.f32.mrb[0].mxu0
        %v748 = vadd.f32 0.0, %v747
        %v749 = vpop.f32.mrb[0].mxu0
        %750 = vmatprep.mubr.bf16.mxu0 0
        %751 = vmatmul.mubr.bf16.gmra.mrb[0].mxu0 %v670
        %v752 = vpop.f32.mrb[0].mxu0
        %v753 = vadd.f32 0.0, %v752
        %v754 = vpop.f32.mrb[0].mxu0
        %v755 = vpop.f32.mrb[0].mxu0
        %v756 = vadd.f32 0.0, %v755
        %v757 = vpop.f32.mrb[0].mxu0
        %758 = vmatprep.mubr.bf16.mxu0 0
        %759 = vmatmul.mubr.bf16.gmra.mrb[0].mxu0 %v673
        %v760 = vpop.f32.mrb[0].mxu0
        %v761 = vadd.f32 0.0, %v760
        %v762 = vpop.f32.mrb[0].mxu0
        %v763 = vpop.f32.mrb[0].mxu0
        %v764 = vadd.f32 0.0, %v763
        %v765 = vpop.f32.mrb[0].mxu0
        %766 = vmatprep.mubr.bf16.mxu0 0
        %767 = vmatmul.mubr.bf16.gmra.mrb[0].mxu0 %v676
        %v768 = vpop.f32.mrb[0].mxu0
        %v769 = vadd.f32 0.0, %v768
        %v770 = vpop.f32.mrb[0].mxu0
        %v771 = vpop.f32.mrb[0].mxu0
        %v772 = vadd.f32 0.0, %v771
        %v773 = vpop.f32.mrb[0].mxu0
        %774 = vdwg.mxu0
        %v775 = vadd.f32 %v511, %v713
        %v776 = vadd.f32 %v514, %v716
        %v777 = vadd.f32 %v519, %v721
        %v778 = vadd.f32 %v522, %v724
        %v779 = vadd.f32 %v527, %v729
        %v780 = vadd.f32 %v530, %v732
        %v781 = vadd.f32 %v535, %v737
        %v782 = vadd.f32 %v538, %v740
        %v783 = vadd.f32 %v543, %v745
        %v784 = vadd.f32 %v546, %v748
        %v785 = vadd.f32 %v551, %v753
        %v786 = vadd.f32 %v554, %v756
        %v787 = vadd.f32 %v559, %v761
        %v788 = vadd.f32 %v562, %v764
        %v789 = vadd.f32 %v567, %v769
        %v790 = vadd.f32 %v570, %v772
        %v791 = vld [vmem:[%s2] sm:$0x1]
        %v793 = vlaneseq
        %v794 = vshrl.u32 %v793, 7
        %v795 = vsub.s32 0, %v794
        %v796 = vrot.slane %v791, %v795
        %v798 = vadd.f32 %v775, %v796
        %v799 = vadd.f32 %v776, %v796
        %v800 = vadd.f32 %v777, %v796
        %v801 = vadd.f32 %v778, %v796
        %v802 = vadd.f32 %v779, %v796
        %v803 = vadd.f32 %v780, %v796
        %v804 = vadd.f32 %v781, %v796
        %v805 = vadd.f32 %v782, %v796
        %v806 = vadd.f32 %v783, %v796
        %v807 = vadd.f32 %v784, %v796
        %v808 = vadd.f32 %v785, %v796
        %v809 = vadd.f32 %v786, %v796
        %v810 = vadd.f32 %v787, %v796
        %v811 = vadd.f32 %v788, %v796
        %v812 = vadd.f32 %v789, %v796
        %v813 = vadd.f32 %v790, %v796
        %v814 = vmax.f32 %v798, 0.0
        %v815 = vmax.f32 %v799, 0.0
        %v816 = vmax.f32 %v800, 0.0
        %v817 = vmax.f32 %v801, 0.0
        %v818 = vmax.f32 %v802, 0.0
        %v819 = vmax.f32 %v803, 0.0
        %v820 = vmax.f32 %v804, 0.0
        %v821 = vmax.f32 %v805, 0.0
        %v822 = vmax.f32 %v806, 0.0
        %v823 = vmax.f32 %v807, 0.0
        %v824 = vmax.f32 %v808, 0.0
        %v825 = vmax.f32 %v809, 0.0
        %v826 = vmax.f32 %v810, 0.0
        %v827 = vmax.f32 %v811, 0.0
        %v828 = vmax.f32 %v812, 0.0
        %v829 = vmax.f32 %v813, 0.0
        %v830 = vpack.c.bf16 %v815, %v814
        %v831 = vpack.c.bf16 %v817, %v816
        %v832 = vpack.c.bf16 %v819, %v818
        %v833 = vpack.c.bf16 %v821, %v820
        %v834 = vpack.c.bf16 %v823, %v822
        %v835 = vpack.c.bf16 %v825, %v824
        %v836 = vpack.c.bf16 %v827, %v826
        %v837 = vpack.c.bf16 %v829, %v828
        %v846 = vunpack.c.l.b16 %v830
        %v847 = vunpack.c.h.b16 %v830
        %v848 = vunpack.c.l.b16 %v831
        %v849 = vunpack.c.h.b16 %v831
        %v850 = vunpack.c.l.b16 %v832
        %v851 = vunpack.c.h.b16 %v832
        %v852 = vunpack.c.l.b16 %v833
        %v853 = vunpack.c.h.b16 %v833
        %v854 = vunpack.c.l.b16 %v834
        %v855 = vunpack.c.h.b16 %v834
        %v856 = vunpack.c.l.b16 %v835
        %v857 = vunpack.c.h.b16 %v835
        %v858 = vunpack.c.l.b16 %v836
        %v859 = vunpack.c.h.b16 %v836
        %v860 = vunpack.c.l.b16 %v837
        %v861 = vunpack.c.h.b16 %v837
        %v862 = vpack.c.b16 %v846, %v846
        %v863 = vpack.c.b16 %v847, %v847
        %v864 = vpack.c.b16 %v848, %v848
        %v865 = vpack.c.b16 %v849, %v849
        %v866 = vpack.c.b16 %v850, %v850
        %v867 = vpack.c.b16 %v851, %v851
        %v868 = vpack.c.b16 %v852, %v852
        %v869 = vpack.c.b16 %v853, %v853
        %v870 = vpack.c.b16 %v854, %v854
        %v871 = vpack.c.b16 %v855, %v855
        %v872 = vpack.c.b16 %v856, %v856
        %v873 = vpack.c.b16 %v857, %v857
        %v874 = vpack.c.b16 %v858, %v858
        %v875 = vpack.c.b16 %v859, %v859
        %v876 = vpack.c.b16 %v860, %v860
        %v877 = vpack.c.b16 %v861, %v861
        %894 = vst [vmem:[%s220] sm:$0xf] %v862
        %895 = vst [vmem:[%s220 + $0x4] sm:$0xf] %v863
        %896 = vst [vmem:[%s220 + $0x8] sm:$0xf] %v864
        %897 = vst [vmem:[%s220 + $0xc] sm:$0xf] %v865
        %898 = vst [vmem:[%s220 + $0x10] sm:$0xf] %v866
        %899 = vst [vmem:[%s220 + $0x14] sm:$0xf] %v867
        %900 = vst [vmem:[%s220 + $0x18] sm:$0xf] %v868
        %901 = vst [vmem:[%s220 + $0x1c] sm:$0xf] %v869
        %902 = vst [vmem:[%s220 + $0x20] sm:$0xf] %v870
        %903 = vst [vmem:[%s220 + $0x24] sm:$0xf] %v871
        %904 = vst [vmem:[%s220 + $0x28] sm:$0xf] %v872
        %905 = vst [vmem:[%s220 + $0x2c] sm:$0xf] %v873
        %906 = vst [vmem:[%s220 + $0x30] sm:$0xf] %v874
        %907 = vst [vmem:[%s220 + $0x34] sm:$0xf] %v875
        %908 = vst [vmem:[%s220 + $0x38] sm:$0xf] %v876
        %909 = vst [vmem:[%s220 + $0x3c] sm:$0xf] %v877
        %v910 = vadd.f32 %v814, %v815
        %v911 = vadd.f32 %v910, %v816
        %v912 = vadd.f32 %v911, %v817
        %v913 = vadd.f32 %v912, %v818
        %v914 = vadd.f32 %v913, %v819
        %v915 = vadd.f32 %v914, %v820
        %v916 = vadd.f32 %v915, %v821
        %v917 = vadd.f32 %v916, %v822
        %v918 = vadd.f32 %v917, %v823
        %v919 = vadd.f32 %v918, %v824
        %v920 = vadd.f32 %v919, %v825
        %v921 = vadd.f32 %v920, %v826
        %v922 = vadd.f32 %v921, %v827
        %v923 = vadd.f32 %v922, %v828
        %v924 = vadd.f32 %v923, %v829
        %v925 = vrot.slane %v924, 4
        %v926 = vadd.f32 %v924, %v925
        %v927 = vrot.slane %v926, 2
        %v928 = vadd.f32 %v926, %v927
        %v929 = vrot.slane %v928, 1
        %v930 = vadd.f32 %v928, %v929
        %931 = vst [vmem:[%s227] sm:$0x1] %v930
        %v932 = vmul.f32 %v814, %v814
        %v933 = vmul.f32 %v815, %v815
        %v934 = vmul.f32 %v816, %v816
        %v935 = vmul.f32 %v817, %v817
        %v936 = vmul.f32 %v818, %v818
        %v937 = vmul.f32 %v819, %v819
        %v938 = vmul.f32 %v820, %v820
        %v939 = vmul.f32 %v821, %v821
        %v940 = vmul.f32 %v822, %v822
        %v941 = vmul.f32 %v823, %v823
        %v942 = vmul.f32 %v824, %v824
        %v943 = vmul.f32 %v825, %v825
        %v944 = vmul.f32 %v826, %v826
        %v945 = vmul.f32 %v827, %v827
        %v946 = vmul.f32 %v828, %v828
        %v947 = vmul.f32 %v829, %v829
        %v948 = vadd.f32 %v932, %v933
        %v949 = vadd.f32 %v948, %v934
        %v950 = vadd.f32 %v949, %v935
        %v951 = vadd.f32 %v950, %v936
        %v952 = vadd.f32 %v951, %v937
        %v953 = vadd.f32 %v952, %v938
        %v954 = vadd.f32 %v953, %v939
        %v955 = vadd.f32 %v954, %v940
        %v956 = vadd.f32 %v955, %v941
        %v957 = vadd.f32 %v956, %v942
        %v958 = vadd.f32 %v957, %v943
        %v959 = vadd.f32 %v958, %v944
        %v960 = vadd.f32 %v959, %v945
        %v961 = vadd.f32 %v960, %v946
        %v962 = vadd.f32 %v961, %v947
        %v963 = vrot.slane %v962, 4
        %v964 = vadd.f32 %v962, %v963
        %v965 = vrot.slane %v964, 2
        %v966 = vadd.f32 %v964, %v965
        %v967 = vrot.slane %v966, 1
        %v968 = vadd.f32 %v966, %v967
        %969 = vst [vmem:[%s227 + $0x1] sm:$0x1] %v968
        %s970 = sand.u32 %s114, 1
        %s971 = scalar_lea.sflag [#allocation3], %s970
        %s972 = sand.u32 %s114, 1
        %s973 = smul.addr %s972, 64
        %s974 = scalar_lea.vmem [#allocation2], %s973
        %s975 = sand.u32 %s142, 1
        %s976 = scalar_lea.sflag [#allocation5], %s975
        %s977 = sand.u32 %s142, 1
        %s978 = smul.addr %s977, 2
        %s979 = scalar_lea.vmem [#allocation4], %s978
        // Predicated region
        $region33: #{tpu_custom_call.1} parent=31 // pred_check
          %p980 = pneg %p124
        $region34: #{tpu_custom_call.1} parent=31 // pred_check_branch
          %982 = sbr.rel (%p980) target = $region36
        $region35: #{tpu_custom_call.1} parent=31 // pred_region
          %s983 = smul.u32 16, %s27
          %s985 = ssub.s32 1024, 1024
          %986 = vsyncadd %s971, %s985
          %s987 = smul.addr %s26, 32
          %s988 = sadd.s32 %s983, %s987
          %s989 = smul.addr %s988, 64
          %s990 = scalar_lea.hbm %s3, %s989
          %s991 = sshll.u32 %s974, 4
          %s992 = int_to_ptr.vmem [resolvable:$true] %s991
          %997 = dma.vmem_to_hbm [thread:$0]  %s992, 1024, %s990, %s971, 64, 64, 4
        $region36: #{tpu_custom_call.1} parent=31 // pred_fallthru
          _
        // Predicated region
        $region37: #{tpu_custom_call.1} parent=31 // pred_check
          %p998 = pneg %p152
        $region38: #{tpu_custom_call.1} parent=31 // pred_check_branch
          %1000 = sbr.rel (%p998) target = $region40
        $region39: #{tpu_custom_call.1} parent=31 // pred_region
          %s1002 = ssub.s32 32, 32
          %1003 = vsyncadd %s976, %s1002
          %s1004 = smul.addr %s26, 2
          %s1005 = sadd.s32 %s27, %s1004
          %s1006 = smul.addr %s1005, 32
          %s1007 = scalar_lea.hbm %s4, %s1006
          %s1009 = sshll.u32 %s979, 4
          %s1010 = int_to_ptr.vmem [resolvable:$true] %s1009
          %1012 = dma.vmem_to_hbm [thread:$0]  %s1010, 32, %s1007, %s976
        $region40: #{tpu_custom_call.1} parent=31 // pred_fallthru
          _
      $region32: #{tpu_custom_call.1} parent=5 // pred_fallthru
        _
      %p1013 = scmp.le.s32.totalorder 2, %s17
      // Predicated region
      $region41: #{tpu_custom_call.1} parent=5 // pred_check
        %p1014 = pneg %p1013
      $region42: #{tpu_custom_call.1} parent=5 // pred_check_branch
        %1016 = sbr.rel (%p1014) target = $region44
      $region43: #{tpu_custom_call.1} parent=5 // pred_region
        %s1017 = ssub.s32 %s17, 2
        // Predicated region
        $region45: #{tpu_custom_call.1} parent=43 // pred_check
          %p1018 = pneg %p130
        $region46: #{tpu_custom_call.1} parent=43 // pred_check_branch
          %1020 = sbr.rel (%p1018) target = $region48
        $region47: #{tpu_custom_call.1} parent=43 // pred_region
          %s1021 = sand.u32 %s115, 1
          %s1022 = scalar_lea.sflag [#allocation3], %s1021
          %s1023 = sand.u32 %s115, 1
          %s1024 = smul.addr %s1023, 64
          %s1025 = scalar_lea.vmem [#allocation2], %s1024
          %1026 = dma.done %s1022, 1024
        $region48: #{tpu_custom_call.1} parent=43 // pred_fallthru
          _
        // Predicated region
        $region49: #{tpu_custom_call.1} parent=43 // pred_check
          %p1027 = pneg %p158
        $region50: #{tpu_custom_call.1} parent=43 // pred_check_branch
          %1029 = sbr.rel (%p1027) target = $region52
        $region51: #{tpu_custom_call.1} parent=43 // pred_region
          %s1030 = sand.u32 %s143, 1
          %s1031 = scalar_lea.sflag [#allocation5], %s1030
          %s1032 = sand.u32 %s143, 1
          %s1033 = smul.addr %s1032, 2
          %s1034 = scalar_lea.vmem [#allocation4], %s1033
          %1035 = dma.done %s1031, 32
        $region52: #{tpu_custom_call.1} parent=43 // pred_fallthru
          _
      $region44: #{tpu_custom_call.1} parent=5 // pred_fallthru
        _
    $region6: #{tpu_custom_call.1} parent=1 // loop_footer
      %s21 = sadd.s32 1, %s17
    $region7: #{tpu_custom_call.1} parent=1 // loop_footer_branch
      %16 = sbr.rel target = $region3
    $region8: #{tpu_custom_call.1} parent=1 // loop_exit
      _
    %1036 = vsyncpa [#allocation3], 1
    %s1037 = scalar_lea.sflag [#allocation3], 1
    %1038 = vsyncpa %s1037, 1
    %1039 = vsyncpa [#allocation5], 1
    %s1040 = scalar_lea.sflag [#allocation5], 1
    %1041 = vsyncpa %s1040, 1

</llo_original>
